<compile_context>
chip_gen: v6e
topology: v6e:2x2x1
jax: 0.10.0
libtpu: 0.0.40
codegen_flags: <defaults>
</compile_context>

<pallas_src>
import jax
import jax.numpy as jnp
from jax.experimental import pallas as pl
from jax.experimental.pallas import tpu as pltpu

# ---- cvConfig.loss equivalent (deterministic, in-script) --------------------
LOSS_CFG = dict(split=7, guesser=10, num_cls=20, qutity=1)
S = LOSS_CFG["split"]
D = LOSS_CFG["guesser"] // (4 + 1) * 5 + LOSS_CFG["num_cls"] // LOSS_CFG["qutity"]  # = 30
FLAT = S * S * D  # 1470


def _pred_kernel(pred_ref, out_ref):
    # Lane-dense tile: (TN, 1470). Pure vld/vst copy — the (N,S,S,D) view is a
    # free metadata reshape done outside the kernel.
    # TODO(synk): the rest of Loss.forward (IoU + coord/obj/class terms over
    # `target`) is truncated in the reference source; fuse it here (producing
    # small partial sums) once it is specified.
    out_ref[...] = pred_ref[...]


def loss_forward(pred, target):
    """Mirrors the documented part of Loss.forward(pred, target)."""
    del target  # unused in the visible portion of the reference forward
    n = pred.shape[0]
    flat = pred.reshape(n, FLAT)  # free metadata reshape (row-major, == torch)

    # Batch tile: whole batch if small (block dim == full array dim is always
    # legal), otherwise 512 rows (multiple of 8 sublanes; ~3 MB f32/buffer so
    # double-buffered in+out fits every generation's scoped-VMEM default).
    tn = n if n <= 512 else 512
    grid = (pl.cdiv(n, tn),)

    bytes_accessed = 2 * n * FLAT * flat.dtype.itemsize

    out_flat = pl.pallas_call(
        _pred_kernel,
        out_shape=jax.ShapeDtypeStruct((n, FLAT), pred.dtype),
        grid=grid,
        in_specs=[pl.BlockSpec((tn, FLAT), lambda i: (i, 0))],
        out_specs=pl.BlockSpec((tn, FLAT), lambda i: (i, 0)),
        compiler_params=pltpu.CompilerParams(
            dimension_semantics=("parallel",),
        ),
        cost_estimate=pl.CostEstimate(
            flops=0, transcendentals=0, bytes_accessed=bytes_accessed
        ),
    )(flat)

    # The documented reshape itself: metadata-only in XLA (zero bytes moved).
    return out_flat.reshape(n, S, S, D)


if __name__ == "__main__":
    key = jax.random.PRNGKey(0)
    kp, kt = jax.random.split(key)

    N = 2
    # pred as the flat network output (N, S*S*D) = (2, 1470); target in grid form.
    pred = jax.random.normal(kp, (N, FLAT), dtype=jnp.float32)
    target = jax.random.normal(kt, (N, S, S, D), dtype=jnp.float32)

    out = loss_forward(pred, target)
    out = jax.block_until_ready(out)

    # Correctness: must match plain-JAX / torch row-major reshape semantics.
    ref = pred.reshape(N, S, S, D)
    assert out.shape == (N, S, S, D)
    assert jnp.allclose(out, ref), "Pallas kernel output mismatch"

    print("KERNEL_OK")
</pallas_src>

<mosaic_0001>
module attributes {stable_mosaic.version = 11 : i64} {
  func.func @_pred_kernel(%arg0: i32, %arg1: memref<2x1470xf32, #tpu.memory_space<vmem>>, %arg2: memref<2x1470xf32, #tpu.memory_space<vmem>>) attributes {dimension_semantics = [#tpu.dimension_semantics<parallel>], iteration_bounds = array<i64: 1>, scalar_prefetch = 0 : i64, scratch_operands = 0 : i64, tpu.core_type = #tpu.core_type<tc>, window_params = [{transform_indices = @transform_0, window_bounds = array<i64: 2, 1470>}, {transform_indices = @transform_1, window_bounds = array<i64: 2, 1470>}]} {
    %c0 = arith.constant 0 : index
    %c0_0 = arith.constant 0 : index
    %0 = vector.load %arg1[%c0, %c0_0] : memref<2x1470xf32, #tpu.memory_space<vmem>>, vector<2x1470xf32>
    %c0_1 = arith.constant 0 : index
    %c0_2 = arith.constant 0 : index
    %1 = vector.load %arg2[%c0_1, %c0_2] : memref<2x1470xf32, #tpu.memory_space<vmem>>, vector<2x1470xf32>
    tpu.vector_store %arg2[%c0_1, %c0_2], %0 {strides = array<i32>} : memref<2x1470xf32, #tpu.memory_space<vmem>>, vector<2x1470xf32>,
    return
  }
  func.func @transform_0(%arg0: i32) -> (i32, i32) {
    %c0_i32 = arith.constant 0 : i32
    %c0_i32_0 = arith.constant 0 : i32
    return %arg0, %c0_i32 : i32, i32
  }
  func.func @transform_1(%arg0: i32) -> (i32, i32) {
    %c0_i32 = arith.constant 0 : i32
    %c0_i32_0 = arith.constant 0 : i32
    return %arg0, %c0_i32 : i32, i32
  }
}

</mosaic_0001>

<llo_original>
// kernel: tpu_custom_call.1
$region0: #{tpu_custom_call.1}
  #allocation0 [shape = 'u32[]', space=smem, size = 0x4, offset = 0x4, fixed_abs, tag = 'smem constant byte address 0x4 - core index']
  #allocation1 [shape = 'u32[144,128]{1,0:T(1,128)}', space=vmem, size = 0x12000, scoped, tag = 'internal scratch']
  %s0 = inlined_call_operand.hbm [shape: f32[2,1470], index: 0, kind: input, shape index: {}]
  %s1 = inlined_call_operand.hbm [shape: f32[2,1470], index: 1, kind: output, shape index: {}]
  %s2 = sld [smem:[#allocation0]]
  $region18: #{tpu_custom_call.1} parent=0
    _
  %s4 = ssub.s32 1, %s2
  %s5 = scalar_select 0, %s4, %s2
  $region1: #{tpu_custom_call.1} parent=0
    #allocation2 [shape = 'u8[12288]{0}', space=vmem, size = 0x3000, scoped, tag = 'input window, operand 0, single buffered']
    #allocation3 [shape = 's32[1]{0}', space=sflag, size = 0x4, scoped, tag = 'scoped memory for tpu_custom_call.1']
    #allocation4 [shape = 's32[1]{0}', space=sflag, size = 0x4, scoped, tag = 'scoped memory for tpu_custom_call.1']
    #allocation5 [shape = 'u8[12288]{0}', space=vmem, size = 0x3000, scoped, tag = 'output window, operand 0, single buffered']
    %6 = vsyncpa [#allocation3], 0
    %7 = vsyncpa [#allocation4], 0
    // Predicated region
    $region2: #{tpu_custom_call.1} parent=1 // pred_check
      _
    $region3: #{tpu_custom_call.1} parent=1 // pred_check_branch
      %9 = sbr.rel (0) target = $region5
    $region4: #{tpu_custom_call.1} parent=1 // pred_region
      %s11 = ssub.s32 384, 384
      %12 = vsyncadd [#allocation3], %s11
      %s14 = sshll.u32 [#allocation2], 4
      %s15 = int_to_ptr.vmem [resolvable:$true] %s14
      %17 = dma.hbm_to_vmem [thread:$0]  %s0, 384, %s15, [#allocation3]
    $region5: #{tpu_custom_call.1} parent=1 // pred_fallthru
      _
    // Predicated region
    $region6: #{tpu_custom_call.1} parent=1 // pred_check
      _
    $region7: #{tpu_custom_call.1} parent=1 // pred_check_branch
      %19 = sbr.rel (0) target = $region9
    $region8: #{tpu_custom_call.1} parent=1 // pred_region
      %20 = dma.done [#allocation3], 384
    $region9: #{tpu_custom_call.1} parent=1 // pred_fallthru
      _
    %v21 = vld [vmem:[#allocation2] sm:$0xff]
    %v22 = vld [vmem:[#allocation2 + $0x8] sm:$0xff]
    %v23 = vld [vmem:[#allocation2 + $0x10] sm:$0xff]
    %24 = vst [vmem:[#allocation5] sm:$0xff] %v21
    %25 = vst [vmem:[#allocation5 + $0x8] sm:$0xff] %v22
    %vm26 = vcmask 1041408
    %vm27 = vcmask 1043458
    %vm28 = vmor %vm27, %vm26
    %vm29 = vcmask 1045508
    %vm30 = vmor %vm29, %vm28
    %vm31 = vcmask 506886
    %vm32 = vmor %vm31, %vm30
    %33 = vst.msk [vmem:[#allocation5 + $0x10] sm:$0xff] %vm32, %v23
    // Predicated region
    $region10: #{tpu_custom_call.1} parent=1 // pred_check
      _
    $region11: #{tpu_custom_call.1} parent=1 // pred_check_branch
      %35 = sbr.rel (0) target = $region13
    $region12: #{tpu_custom_call.1} parent=1 // pred_region
      %s37 = ssub.s32 384, 384
      %38 = vsyncadd [#allocation4], %s37
      %s40 = sshll.u32 [#allocation5], 4
      %s41 = int_to_ptr.vmem [resolvable:$true] %s40
      %43 = dma.vmem_to_hbm [thread:$0]  %s41, 384, %s1, [#allocation4]
    $region13: #{tpu_custom_call.1} parent=1 // pred_fallthru
      _
    // Predicated region
    $region14: #{tpu_custom_call.1} parent=1 // pred_check
      _
    $region15: #{tpu_custom_call.1} parent=1 // pred_check_branch
      %45 = sbr.rel (0) target = $region17
    $region16: #{tpu_custom_call.1} parent=1 // pred_region
      %46 = dma.done [#allocation4], 384
    $region17: #{tpu_custom_call.1} parent=1 // pred_fallthru
      _
    %47 = vsyncpa [#allocation3], 1
    %48 = vsyncpa [#allocation4], 1

</llo_original>
